<compile_context>
chip_gen: v7x
topology: tpu7x:2x2x1
jax: 0.10.0
libtpu: 0.0.40
codegen_flags: <defaults>
</compile_context>

<pallas_src>
import jax
import jax.numpy as jnp
from jax.experimental import pallas as pl
from jax.experimental.pallas import tpu as pltpu

HIDDEN_SIZE = 10
INPUT_SIZE = 1
OUTPUT_SIZE = 1

PACK_ROWS = 16
PACK_W = 16

# v5e/v6e: keep False (VPU+XLU path).  v7x: benchmark both and keep the winner.
USE_MXU_RECURRENCE = False


def _rnn_linear_kernel(x_ref, h0_ref, p_ref, out_ref, hseq):
    """Unrolled tanh-RNN over time + hoisted Linear head.

    x_ref:   (T, 1)    per-step scalar inputs (input_size == 1)
    h0_ref:  (1, H)    initial hidden state
    p_ref:   (16, 16)  packed parameters:
               rows 0..H-1, lanes 0..H-1 : W_hh^T
               row  H     , lanes 0..H-1 : W_ih^T (row)
               row  H+1   , lanes 0..H-1 : b_ih + b_hh
               row  H+2   , lanes 0..H-1 : W_lin (row)
               row  H+3   , lane 0       : b_lin
    out_ref: (2, 16)   row 0 lanes 0..T-1 : per-step Linear outputs y
                       row 1 lanes 0..H-1 : final hidden state h_T
    hseq:    (T, H)    VMEM scratch holding all hidden states (off the chain)
    """
    T = x_ref.shape[0]
    H = HIDDEN_SIZE

    whh_t = p_ref[0:H, 0:H]              # (H, H) = W_hh^T
    wih = p_ref[H:H + 1, 0:H]            # (1, H) = W_ih^T row
    b = p_ref[H + 1:H + 2, 0:H]          # (1, H) = b_ih + b_hh
    wlin = p_ref[H + 2:H + 3, 0:H]       # (1, H)
    blin = p_ref[H + 3:H + 4, 0:1]       # (1, 1)

    # Hoisted input contribution (+ bias) for every timestep: a single
    # (T,1)*(1,H) vreg op, never on the sequential critical path.
    ih_all = x_ref[...] * wih + b        # (T, H)

    # Sequential recurrence, fully unrolled (T static & small).  `h` is carried
    # as a value -> lives in vregs; no per-step VMEM round-trip on the chain.
    h = h0_ref[...]                      # (1, H)
    for t in range(T):
        if USE_MXU_RECURRENCE:
            # (1,H)x(H,H) on the MXU pays array-fill + result-FIFO latency on
            # every step of the serial chain; only worth it if measured faster
            # (candidate on v7x, where the MRB removes the FIFO-pop cost).
            hh = jnp.dot(h, whh_t, preferred_element_type=jnp.float32)
        else:
            # One small transpose (XLU) + broadcast multiply (VPU) + sublane
            # reduce (XLU): exact f32, uses otherwise-idle slots, no MXU
            # round-trip latency on the dependency chain.
            hh = jnp.sum(jnp.transpose(h) * whh_t, axis=0, keepdims=True)
        h = jnp.tanh(ih_all[t:t + 1, :] + hh)        # (1, H)
        hseq[t:t + 1, :] = h             # off-critical-path spill for the head

    # Hoisted Linear head over all timesteps at once (output_size == 1):
    # one broadcast multiply + one lane reduce on a single (T, H) tile.
    y_col = jnp.sum(hseq[...] * wlin, axis=-1, keepdims=True) + blin   # (T, 1)

    # Single merged output slab -> one output DMA.
    out_ref[...] = jnp.zeros_like(out_ref)
    out_ref[0:1, 0:T] = jnp.transpose(y_col)         # (1, T)
    out_ref[1:2, 0:H] = h                            # (1, H)


def prepare_params(params):
    """One-time, call-invariant packing of all parameters into one f32 slab."""
    H = HIDDEN_SIZE
    p = jnp.zeros((PACK_ROWS, PACK_W), jnp.float32)
    p = p.at[0:H, 0:H].set(jnp.transpose(params["w_hh"]).astype(jnp.float32))
    p = p.at[H, 0:H].set(params["w_ih"][:, 0].astype(jnp.float32))
    p = p.at[H + 1, 0:H].set((params["b_ih"] + params["b_hh"]).astype(jnp.float32))
    p = p.at[H + 2, 0:H].set(params["w_lin"][0].astype(jnp.float32))
    p = p.at[H + 3, 0].set(params["b_lin"][0].astype(jnp.float32))
    return p


def net_forward(x, hidden_prev, packed_params):
    """x: (1, T, 1) f32 batch_first; hidden_prev: (1, 1, H); packed_params: (16, 16)."""
    B, T, I = x.shape
    assert I == INPUT_SIZE
    assert B == 1, "kernel is specialized for batch size 1 (as in the reference module)"
    H = HIDDEN_SIZE

    x_col = x[0].astype(jnp.float32)                 # (T, 1)
    h0 = hidden_prev[0].astype(jnp.float32)          # (1, H)

    vmem = pl.BlockSpec(memory_space=pltpu.MemorySpace.VMEM)
    out_slab = pl.pallas_call(
        _rnn_linear_kernel,
        out_shape=jax.ShapeDtypeStruct((2, PACK_W), jnp.float32),
        in_specs=[vmem, vmem, vmem],
        out_specs=vmem,
        scratch_shapes=[pltpu.VMEM((T, H), jnp.float32)],
    )(x_col, h0, packed_params)

    # Row 0 = y over time (t-minor == torch's reshape(-1, H) order for B == 1),
    # row 1 = final hidden state.
    out = out_slab[0, :T].reshape(B * T, OUTPUT_SIZE)[None]   # (1, B*T, 1)
    h_T = out_slab[1, :H].reshape(1, B, H)                    # (1, B, H)
    return out, h_T


def _reference_forward(x, hidden_prev, params):
    """Pure-JAX reference of the PyTorch forward, for correctness checking."""
    hi = jax.lax.Precision.HIGHEST
    B, T, _ = x.shape
    h = hidden_prev[0]                                        # (B, H)
    hs = []
    for t in range(T):
        h = jnp.tanh(jnp.dot(x[:, t, :], params["w_ih"].T, precision=hi)
                     + params["b_ih"]
                     + jnp.dot(h, params["w_hh"].T, precision=hi)
                     + params["b_hh"])
        hs.append(h)
    out = jnp.stack(hs, axis=1).reshape(-1, HIDDEN_SIZE)      # (B*T, H)
    out = jnp.dot(out, params["w_lin"].T, precision=hi) + params["b_lin"]
    return out[None], h[None]


def init_params(key):
    """Deterministic init matching PyTorch parameter shapes."""
    ks = jax.random.split(key, 6)
    bound = 1.0 / jnp.sqrt(HIDDEN_SIZE)
    u = lambda k, shape: jax.random.uniform(k, shape, jnp.float32, -bound, bound)
    return {
        "w_ih": u(ks[0], (HIDDEN_SIZE, INPUT_SIZE)),
        "w_hh": u(ks[1], (HIDDEN_SIZE, HIDDEN_SIZE)),
        "b_ih": u(ks[2], (HIDDEN_SIZE,)),
        "b_hh": u(ks[3], (HIDDEN_SIZE,)),
        "w_lin": u(ks[4], (OUTPUT_SIZE, HIDDEN_SIZE)),
        "b_lin": u(ks[5], (OUTPUT_SIZE,)),
    }


if __name__ == "__main__":
    key = jax.random.PRNGKey(0)
    k_p, k_x = jax.random.split(key)

    B, T = 1, 8
    params = init_params(k_p)
    packed = prepare_params(params)          # one-time packing, not per forward
    x = jax.random.normal(k_x, (B, T, INPUT_SIZE), dtype=jnp.float32)
    hidden_prev = jnp.zeros((1, B, HIDDEN_SIZE), dtype=jnp.float32)

    out, h_T = net_forward(x, hidden_prev, packed)
    out, h_T = jax.block_until_ready((out, h_T))

    ref_out, ref_h = _reference_forward(x, hidden_prev, params)
    assert out.shape == (1, B * T, OUTPUT_SIZE), out.shape
    assert h_T.shape == (1, B, HIDDEN_SIZE), h_T.shape
    assert jnp.allclose(out, ref_out, atol=1e-5), "output mismatch"
    assert jnp.allclose(h_T, ref_h, atol=1e-5), "hidden state mismatch"

    print("KERNEL_OK")
</pallas_src>

<mosaic_0001>
module attributes {stable_mosaic.version = 11 : i64} {
  func.func @_rnn_linear_kernel(%arg0: memref<8x1xf32, #tpu.memory_space<vmem>>, %arg1: memref<1x10xf32, #tpu.memory_space<vmem>>, %arg2: memref<16x16xf32, #tpu.memory_space<vmem>>, %arg3: memref<2x16xf32, #tpu.memory_space<vmem>>, %arg4: memref<8x10xf32, #tpu.memory_space<vmem>>) attributes {dimension_semantics = [], scalar_prefetch = 0 : i64, scratch_operands = 1 : i64, tpu.core_type = #tpu.core_type<tc>} {
    %c0 = arith.constant 0 : index
    %c0_0 = arith.constant 0 : index
    %0 = vector.load %arg2[%c0, %c0_0] : memref<16x16xf32, #tpu.memory_space<vmem>>, vector<10x10xf32>
    %c10 = arith.constant 10 : index
    %c0_1 = arith.constant 0 : index
    %1 = vector.load %arg2[%c10, %c0_1] : memref<16x16xf32, #tpu.memory_space<vmem>>, vector<1x10xf32>
    %c11 = arith.constant 11 : index
    %c0_2 = arith.constant 0 : index
    %2 = vector.load %arg2[%c11, %c0_2] : memref<16x16xf32, #tpu.memory_space<vmem>>, vector<1x10xf32>
    %c12 = arith.constant 12 : index
    %c0_3 = arith.constant 0 : index
    %3 = vector.load %arg2[%c12, %c0_3] : memref<16x16xf32, #tpu.memory_space<vmem>>, vector<1x10xf32>
    %c13 = arith.constant 13 : index
    %c0_4 = arith.constant 0 : index
    %4 = vector.load %arg2[%c13, %c0_4] : memref<16x16xf32, #tpu.memory_space<vmem>>, vector<1x1xf32>
    %c0_5 = arith.constant 0 : index
    %c0_6 = arith.constant 0 : index
    %5 = vector.load %arg0[%c0_5, %c0_6] : memref<8x1xf32, #tpu.memory_space<vmem>>, vector<8x1xf32>
    %6 = vector.broadcast %5 : vector<8x1xf32> to vector<8x10xf32>
    %7 = vector.broadcast %1 : vector<1x10xf32> to vector<8x10xf32>
    %8 = arith.mulf %6, %7 : vector<8x10xf32>
    %9 = vector.broadcast %2 : vector<1x10xf32> to vector<8x10xf32>
    %10 = arith.addf %8, %9 : vector<8x10xf32>
    %c0_7 = arith.constant 0 : index
    %c0_8 = arith.constant 0 : index
    %11 = vector.load %arg1[%c0_7, %c0_8] : memref<1x10xf32, #tpu.memory_space<vmem>>, vector<1x10xf32>
    %12 = tpu.transpose %11, [1, 0] : vector<1x10xf32> -> vector<10x1xf32>
    %13 = vector.broadcast %12 : vector<10x1xf32> to vector<10x10xf32>
    %14 = arith.mulf %13, %0 : vector<10x10xf32>
    %cst = arith.constant dense<0.000000e+00> : vector<10xf32>
    %15 = vector.multi_reduction <add>, %14, %cst [0] : vector<10x10xf32> to vector<10xf32>
    %16 = vector.shape_cast %15 : vector<10xf32> to vector<1x10xf32>
    %17 = vector.extract_strided_slice %10 {offsets = [0, 0], sizes = [1, 10], strides = [1, 1]} : vector<8x10xf32> to vector<1x10xf32>
    %18 = arith.addf %17, %16 : vector<1x10xf32>
    %19 = math.tanh %18 : vector<1x10xf32>
    %c0_9 = arith.constant 0 : index
    %c0_10 = arith.constant 0 : index
    %20 = vector.load %arg4[%c0_9, %c0_10] : memref<8x10xf32, #tpu.memory_space<vmem>>, vector<1x10xf32>
    tpu.vector_store %arg4[%c0_9, %c0_10], %19 {strides = array<i32>} : memref<8x10xf32, #tpu.memory_space<vmem>>, vector<1x10xf32>,
    %21 = tpu.transpose %19, [1, 0] : vector<1x10xf32> -> vector<10x1xf32>
    %22 = vector.broadcast %21 : vector<10x1xf32> to vector<10x10xf32>
    %23 = arith.mulf %22, %0 : vector<10x10xf32>
    %cst_11 = arith.constant dense<0.000000e+00> : vector<10xf32>
    %24 = vector.multi_reduction <add>, %23, %cst_11 [0] : vector<10x10xf32> to vector<10xf32>
    %25 = vector.shape_cast %24 : vector<10xf32> to vector<1x10xf32>
    %26 = vector.extract_strided_slice %10 {offsets = [1, 0], sizes = [1, 10], strides = [1, 1]} : vector<8x10xf32> to vector<1x10xf32>
    %27 = arith.addf %26, %25 : vector<1x10xf32>
    %28 = math.tanh %27 : vector<1x10xf32>
    %c1 = arith.constant 1 : index
    %c0_12 = arith.constant 0 : index
    %29 = vector.load %arg4[%c1, %c0_12] : memref<8x10xf32, #tpu.memory_space<vmem>>, vector<1x10xf32>
    tpu.vector_store %arg4[%c1, %c0_12], %28 {strides = array<i32>} : memref<8x10xf32, #tpu.memory_space<vmem>>, vector<1x10xf32>,
    %30 = tpu.transpose %28, [1, 0] : vector<1x10xf32> -> vector<10x1xf32>
    %31 = vector.broadcast %30 : vector<10x1xf32> to vector<10x10xf32>
    %32 = arith.mulf %31, %0 : vector<10x10xf32>
    %cst_13 = arith.constant dense<0.000000e+00> : vector<10xf32>
    %33 = vector.multi_reduction <add>, %32, %cst_13 [0] : vector<10x10xf32> to vector<10xf32>
    %34 = vector.shape_cast %33 : vector<10xf32> to vector<1x10xf32>
    %35 = vector.extract_strided_slice %10 {offsets = [2, 0], sizes = [1, 10], strides = [1, 1]} : vector<8x10xf32> to vector<1x10xf32>
    %36 = arith.addf %35, %34 : vector<1x10xf32>
    %37 = math.tanh %36 : vector<1x10xf32>
    %c2 = arith.constant 2 : index
    %c0_14 = arith.constant 0 : index
    %38 = vector.load %arg4[%c2, %c0_14] : memref<8x10xf32, #tpu.memory_space<vmem>>, vector<1x10xf32>
    tpu.vector_store %arg4[%c2, %c0_14], %37 {strides = array<i32>} : memref<8x10xf32, #tpu.memory_space<vmem>>, vector<1x10xf32>,
    %39 = tpu.transpose %37, [1, 0] : vector<1x10xf32> -> vector<10x1xf32>
    %40 = vector.broadcast %39 : vector<10x1xf32> to vector<10x10xf32>
    %41 = arith.mulf %40, %0 : vector<10x10xf32>
    %cst_15 = arith.constant dense<0.000000e+00> : vector<10xf32>
    %42 = vector.multi_reduction <add>, %41, %cst_15 [0] : vector<10x10xf32> to vector<10xf32>
    %43 = vector.shape_cast %42 : vector<10xf32> to vector<1x10xf32>
    %44 = vector.extract_strided_slice %10 {offsets = [3, 0], sizes = [1, 10], strides = [1, 1]} : vector<8x10xf32> to vector<1x10xf32>
    %45 = arith.addf %44, %43 : vector<1x10xf32>
    %46 = math.tanh %45 : vector<1x10xf32>
    %c3 = arith.constant 3 : index
    %c0_16 = arith.constant 0 : index
    %47 = vector.load %arg4[%c3, %c0_16] : memref<8x10xf32, #tpu.memory_space<vmem>>, vector<1x10xf32>
    tpu.vector_store %arg4[%c3, %c0_16], %46 {strides = array<i32>} : memref<8x10xf32, #tpu.memory_space<vmem>>, vector<1x10xf32>,
    %48 = tpu.transpose %46, [1, 0] : vector<1x10xf32> -> vector<10x1xf32>
    %49 = vector.broadcast %48 : vector<10x1xf32> to vector<10x10xf32>
    %50 = arith.mulf %49, %0 : vector<10x10xf32>
    %cst_17 = arith.constant dense<0.000000e+00> : vector<10xf32>
    %51 = vector.multi_reduction <add>, %50, %cst_17 [0] : vector<10x10xf32> to vector<10xf32>
    %52 = vector.shape_cast %51 : vector<10xf32> to vector<1x10xf32>
    %53 = vector.extract_strided_slice %10 {offsets = [4, 0], sizes = [1, 10], strides = [1, 1]} : vector<8x10xf32> to vector<1x10xf32>
    %54 = arith.addf %53, %52 : vector<1x10xf32>
    %55 = math.tanh %54 : vector<1x10xf32>
    %c4 = arith.constant 4 : index
    %c0_18 = arith.constant 0 : index
    %56 = vector.load %arg4[%c4, %c0_18] : memref<8x10xf32, #tpu.memory_space<vmem>>, vector<1x10xf32>
    tpu.vector_store %arg4[%c4, %c0_18], %55 {strides = array<i32>} : memref<8x10xf32, #tpu.memory_space<vmem>>, vector<1x10xf32>,
    %57 = tpu.transpose %55, [1, 0] : vector<1x10xf32> -> vector<10x1xf32>
    %58 = vector.broadcast %57 : vector<10x1xf32> to vector<10x10xf32>
    %59 = arith.mulf %58, %0 : vector<10x10xf32>
    %cst_19 = arith.constant dense<0.000000e+00> : vector<10xf32>
    %60 = vector.multi_reduction <add>, %59, %cst_19 [0] : vector<10x10xf32> to vector<10xf32>
    %61 = vector.shape_cast %60 : vector<10xf32> to vector<1x10xf32>
    %62 = vector.extract_strided_slice %10 {offsets = [5, 0], sizes = [1, 10], strides = [1, 1]} : vector<8x10xf32> to vector<1x10xf32>
    %63 = arith.addf %62, %61 : vector<1x10xf32>
    %64 = math.tanh %63 : vector<1x10xf32>
    %c5 = arith.constant 5 : index
    %c0_20 = arith.constant 0 : index
    %65 = vector.load %arg4[%c5, %c0_20] : memref<8x10xf32, #tpu.memory_space<vmem>>, vector<1x10xf32>
    tpu.vector_store %arg4[%c5, %c0_20], %64 {strides = array<i32>} : memref<8x10xf32, #tpu.memory_space<vmem>>, vector<1x10xf32>,
    %66 = tpu.transpose %64, [1, 0] : vector<1x10xf32> -> vector<10x1xf32>
    %67 = vector.broadcast %66 : vector<10x1xf32> to vector<10x10xf32>
    %68 = arith.mulf %67, %0 : vector<10x10xf32>
    %cst_21 = arith.constant dense<0.000000e+00> : vector<10xf32>
    %69 = vector.multi_reduction <add>, %68, %cst_21 [0] : vector<10x10xf32> to vector<10xf32>
    %70 = vector.shape_cast %69 : vector<10xf32> to vector<1x10xf32>
    %71 = vector.extract_strided_slice %10 {offsets = [6, 0], sizes = [1, 10], strides = [1, 1]} : vector<8x10xf32> to vector<1x10xf32>
    %72 = arith.addf %71, %70 : vector<1x10xf32>
    %73 = math.tanh %72 : vector<1x10xf32>
    %c6 = arith.constant 6 : index
    %c0_22 = arith.constant 0 : index
    %74 = vector.load %arg4[%c6, %c0_22] : memref<8x10xf32, #tpu.memory_space<vmem>>, vector<1x10xf32>
    tpu.vector_store %arg4[%c6, %c0_22], %73 {strides = array<i32>} : memref<8x10xf32, #tpu.memory_space<vmem>>, vector<1x10xf32>,
    %75 = tpu.transpose %73, [1, 0] : vector<1x10xf32> -> vector<10x1xf32>
    %76 = vector.broadcast %75 : vector<10x1xf32> to vector<10x10xf32>
    %77 = arith.mulf %76, %0 : vector<10x10xf32>
    %cst_23 = arith.constant dense<0.000000e+00> : vector<10xf32>
    %78 = vector.multi_reduction <add>, %77, %cst_23 [0] : vector<10x10xf32> to vector<10xf32>
    %79 = vector.shape_cast %78 : vector<10xf32> to vector<1x10xf32>
    %80 = vector.extract_strided_slice %10 {offsets = [7, 0], sizes = [1, 10], strides = [1, 1]} : vector<8x10xf32> to vector<1x10xf32>
    %81 = arith.addf %80, %79 : vector<1x10xf32>
    %82 = math.tanh %81 : vector<1x10xf32>
    %c7 = arith.constant 7 : index
    %c0_24 = arith.constant 0 : index
    %83 = vector.load %arg4[%c7, %c0_24] : memref<8x10xf32, #tpu.memory_space<vmem>>, vector<1x10xf32>
    tpu.vector_store %arg4[%c7, %c0_24], %82 {strides = array<i32>} : memref<8x10xf32, #tpu.memory_space<vmem>>, vector<1x10xf32>,
    %c0_25 = arith.constant 0 : index
    %c0_26 = arith.constant 0 : index
    %84 = vector.load %arg4[%c0_25, %c0_26] : memref<8x10xf32, #tpu.memory_space<vmem>>, vector<8x10xf32>
    %85 = vector.broadcast %3 : vector<1x10xf32> to vector<8x10xf32>
    %86 = arith.mulf %84, %85 : vector<8x10xf32>
    %cst_27 = arith.constant dense<0.000000e+00> : vector<8xf32>
    %87 = vector.multi_reduction <add>, %86, %cst_27 [1] : vector<8x10xf32> to vector<8xf32>
    %88 = vector.shape_cast %87 : vector<8xf32> to vector<8x1xf32>
    %89 = vector.broadcast %4 : vector<1x1xf32> to vector<8x1xf32>
    %90 = arith.addf %88, %89 : vector<8x1xf32>
    %cst_28 = arith.constant 0.000000e+00 : f32
    %91 = vector.broadcast %cst_28 : f32 to vector<2x16xf32>
    %c0_29 = arith.constant 0 : index
    %c0_30 = arith.constant 0 : index
    %92 = vector.load %arg3[%c0_29, %c0_30] : memref<2x16xf32, #tpu.memory_space<vmem>>, vector<2x16xf32>
    tpu.vector_store %arg3[%c0_29, %c0_30], %91 {strides = array<i32>} : memref<2x16xf32, #tpu.memory_space<vmem>>, vector<2x16xf32>,
    %93 = tpu.transpose %90, [1, 0] : vector<8x1xf32> -> vector<1x8xf32>
    %c0_31 = arith.constant 0 : index
    %c0_32 = arith.constant 0 : index
    %94 = vector.load %arg3[%c0_31, %c0_32] : memref<2x16xf32, #tpu.memory_space<vmem>>, vector<1x8xf32>
    tpu.vector_store %arg3[%c0_31, %c0_32], %93 {strides = array<i32>} : memref<2x16xf32, #tpu.memory_space<vmem>>, vector<1x8xf32>,
    %c1_33 = arith.constant 1 : index
    %c0_34 = arith.constant 0 : index
    %95 = vector.load %arg3[%c1_33, %c0_34] : memref<2x16xf32, #tpu.memory_space<vmem>>, vector<1x10xf32>
    tpu.vector_store %arg3[%c1_33, %c0_34], %82 {strides = array<i32>} : memref<2x16xf32, #tpu.memory_space<vmem>>, vector<1x10xf32>,
    return
  }
}

</mosaic_0001>

<llo_original>
// kernel: tpu_custom_call.1
$region0: #{tpu_custom_call.1}
  #allocation0 [shape = 'u32[]', space=smem, size = 0x4, offset = 0x4, fixed_abs, tag = 'smem constant byte address 0x4 - core index']
  #allocation1 [shape = 'u32[144,128]{1,0:T(1,128)}', space=vmem, size = 0x12000, scoped, tag = 'internal scratch']
  #allocation2 [shape = 'f32[8,10]{1,0:T(8,128)}', space=vmem, size = 0x1000, scoped, tag = 'scratch operand']
  %s0 = inlined_call_operand.vmem [shape: f32[8,1], index: 0, kind: input, shape index: {}]
  %s1 = inlined_call_operand.hbm [shape: f32[1,10], index: 1, kind: input, shape index: {}]
  %s2 = inlined_call_operand.vmem [shape: f32[16,16], index: 2, kind: input, shape index: {}]
  %s3 = inlined_call_operand.hbm [shape: f32[2,16], index: 3, kind: output, shape index: {}]
  %s4 = sld [smem:[#allocation0]]
  $region26: #{tpu_custom_call.1} parent=0
    _
  %s6 = ssub.s32 1, %s4
  %s7 = scalar_select 0, %s6, %s4
  $region1: #{tpu_custom_call.1} parent=0
    #allocation3 [shape = 'u8[512]{0}', space=vmem, size = 0x400, scoped, tag = 'input window, operand 1, single buffered']
    #allocation4 [shape = 's32[1]{0}', space=sflag, size = 0x4, scoped, tag = 'scoped memory for tpu_custom_call.1']
    #allocation5 [shape = 's32[1]{0}', space=sflag, size = 0x4, scoped, tag = 'scoped memory for tpu_custom_call.1']
    #allocation6 [shape = 'u8[1024]{0}', space=vmem, size = 0x400, scoped, tag = 'output window, operand 0, single buffered']
    %8 = vsyncpa [#allocation4], 0
    %9 = vsyncpa [#allocation5], 0
    // Predicated region
    $region2: #{tpu_custom_call.1} parent=1 // pred_check
      _
    $region3: #{tpu_custom_call.1} parent=1 // pred_check_branch
      %11 = sbr.rel (0) target = $region5
    $region4: #{tpu_custom_call.1} parent=1 // pred_region
      _
    $region5: #{tpu_custom_call.1} parent=1 // pred_fallthru
      _
    // Predicated region
    $region6: #{tpu_custom_call.1} parent=1 // pred_check
      _
    $region7: #{tpu_custom_call.1} parent=1 // pred_check_branch
      %13 = sbr.rel (0) target = $region9
    $region8: #{tpu_custom_call.1} parent=1 // pred_region
      %s15 = ssub.s32 16, 16
      %16 = vsyncadd [#allocation4], %s15
      %s18 = sshll.u32 [#allocation3], 4
      %s19 = int_to_ptr.vmem [resolvable:$true] %s18
      %21 = dma.hbm_to_vmem [thread:$0]  %s1, 16, %s19, [#allocation4]
    $region9: #{tpu_custom_call.1} parent=1 // pred_fallthru
      _
    // Predicated region
    $region10: #{tpu_custom_call.1} parent=1 // pred_check
      _
    $region11: #{tpu_custom_call.1} parent=1 // pred_check_branch
      %23 = sbr.rel (0) target = $region13
    $region12: #{tpu_custom_call.1} parent=1 // pred_region
      _
    $region13: #{tpu_custom_call.1} parent=1 // pred_fallthru
      _
    // Predicated region
    $region14: #{tpu_custom_call.1} parent=1 // pred_check
      _
    $region15: #{tpu_custom_call.1} parent=1 // pred_check_branch
      %25 = sbr.rel (0) target = $region17
    $region16: #{tpu_custom_call.1} parent=1 // pred_region
      %26 = dma.done [#allocation4], 16
    $region17: #{tpu_custom_call.1} parent=1 // pred_fallthru
      _
    %v27 = vld [vmem:[%s2] sm:$0xff]
    %v28 = vld [vmem:[%s2 + $0x8] sm:$0x3]
    %v29 = vld [vmem:[%s2 + $0xa] sm:$0x1]
    %v30 = vld [vmem:[%s2 + $0xb] sm:$0x1]
    %v31 = vld [vmem:[%s2 + $0xc] sm:$0x1]
    %v32 = vld [vmem:[%s2 + $0xd] sm:$0x1]
    %v33 = vld [vmem:[%s0] sm:$0xff]
    %35 = vset.pattern.permute.xlu0 0
    %36 = vperm.xlu0 %35, %v33
    %v37 = vpop.permute.xlu0 %36
    %v39 = vlaneseq
    %v40 = vshrl.u32 %v39, 7
    %v41 = vsub.s32 0, %v40
    %v42 = vrot.slane %v29, %v41
    %v43 = vmul.f32 %v37, %v42
    %v44 = vlaneseq
    %v45 = vshrl.u32 %v44, 7
    %v46 = vsub.s32 0, %v45
    %v47 = vrot.slane %v30, %v46
    %v48 = vadd.f32 %v43, %v47
    %v49 = vld [vmem:[#allocation3] sm:$0x1]
    %50 = vxpose.xlu0.b32.start [1/16] %v49, 128
    %51 = vxpose.xlu0.b32.cont [2/16] 0.0, 128
    %52 = vxpose.xlu0.b32.cont [3/16] 0.0, 128
    %53 = vxpose.xlu0.b32.cont [4/16] 0.0, 128
    %54 = vxpose.xlu0.b32.cont [5/16] 0.0, 128
    %55 = vxpose.xlu0.b32.cont [6/16] 0.0, 128
    %56 = vxpose.xlu0.b32.cont [7/16] 0.0, 128
    %57 = vxpose.xlu0.b32.cont [8/16] 0.0, 128
    %58 = vxpose.xlu0.b32.cont [9/16] 0.0, 128
    %59 = vxpose.xlu0.b32.cont [10/16] 0.0, 128
    %60 = vxpose.xlu0.b32.cont [11/16] 0.0, 128
    %61 = vxpose.xlu0.b32.cont [12/16] 0.0, 128
    %62 = vxpose.xlu0.b32.cont [13/16] 0.0, 128
    %63 = vxpose.xlu0.b32.cont [14/16] 0.0, 128
    %64 = vxpose.xlu0.b32.cont [15/16] 0.0, 128
    %65 = vxpose.xlu0.b32.end [16/16] 0.0, 128
    %v66 = vpop.trf.xlu0
    %v67 = vpop.trf.xlu0
    %v68 = vpop.trf.xlu0
    %v69 = vpop.trf.xlu0
    %v70 = vpop.trf.xlu0
    %v71 = vpop.trf.xlu0
    %v72 = vpop.trf.xlu0
    %v73 = vpop.trf.xlu0
    %v74 = vpop.trf.xlu0
    %v75 = vpop.trf.xlu0
    %v76 = vpop.trf.xlu0
    %v77 = vpop.trf.xlu0
    %v78 = vpop.trf.xlu0
    %v79 = vpop.trf.xlu0
    %v80 = vpop.trf.xlu0
    %v81 = vpop.trf.xlu0
    %83 = vset.pattern.permute.xlu0 0
    %84 = vperm.xlu0 %83, %v66
    %v85 = vpop.permute.xlu0 %84
    %88 = vset.pattern.permute.xlu0 0
    %89 = vperm.xlu0 %88, %v67
    %v90 = vpop.permute.xlu0 %89
    %v92 = vmul.f32 %v85, %v27
    %v93 = vmul.f32 %v90, %v28
    %vm94 = vcmask 80896
    %v95 = vsel %vm94, %v92, 0.0
    %vm96 = vcmask 74752
    %v97 = vsel %vm96, %v93, 0.0
    %v98 = vadd.f32 %v95, %v97
    %v99 = vrot.slane %v98, 4
    %v100 = vadd.f32 %v98, %v99
    %v101 = vrot.slane %v100, 2
    %v102 = vadd.f32 %v100, %v101
    %v103 = vrot.slane %v102, 1
    %v104 = vadd.f32 %v102, %v103
    %v105 = vadd.f32 %v48, %v104
    %v106 = vtanh.pop %v105
    %vm107 = vcmask 73728
    %108 = vst.msk [vmem:[#allocation2] sm:$0x1] %vm107, %v106
    %109 = vxpose.xlu0.b32.start [1/16] %v106, 128
    %110 = vxpose.xlu0.b32.cont [2/16] 0.0, 128
    %111 = vxpose.xlu0.b32.cont [3/16] 0.0, 128
    %112 = vxpose.xlu0.b32.cont [4/16] 0.0, 128
    %113 = vxpose.xlu0.b32.cont [5/16] 0.0, 128
    %114 = vxpose.xlu0.b32.cont [6/16] 0.0, 128
    %115 = vxpose.xlu0.b32.cont [7/16] 0.0, 128
    %116 = vxpose.xlu0.b32.cont [8/16] 0.0, 128
    %117 = vxpose.xlu0.b32.cont [9/16] 0.0, 128
    %118 = vxpose.xlu0.b32.cont [10/16] 0.0, 128
    %119 = vxpose.xlu0.b32.cont [11/16] 0.0, 128
    %120 = vxpose.xlu0.b32.cont [12/16] 0.0, 128
    %121 = vxpose.xlu0.b32.cont [13/16] 0.0, 128
    %122 = vxpose.xlu0.b32.cont [14/16] 0.0, 128
    %123 = vxpose.xlu0.b32.cont [15/16] 0.0, 128
    %124 = vxpose.xlu0.b32.end [16/16] 0.0, 128
    %v125 = vpop.trf.xlu0
    %v126 = vpop.trf.xlu0
    %v127 = vpop.trf.xlu0
    %v128 = vpop.trf.xlu0
    %v129 = vpop.trf.xlu0
    %v130 = vpop.trf.xlu0
    %v131 = vpop.trf.xlu0
    %v132 = vpop.trf.xlu0
    %v133 = vpop.trf.xlu0
    %v134 = vpop.trf.xlu0
    %v135 = vpop.trf.xlu0
    %v136 = vpop.trf.xlu0
    %v137 = vpop.trf.xlu0
    %v138 = vpop.trf.xlu0
    %v139 = vpop.trf.xlu0
    %v140 = vpop.trf.xlu0
    %142 = vset.pattern.permute.xlu0 0
    %143 = vperm.xlu0 %142, %v125
    %v144 = vpop.permute.xlu0 %143
    %147 = vset.pattern.permute.xlu0 0
    %148 = vperm.xlu0 %147, %v126
    %v149 = vpop.permute.xlu0 %148
    %v151 = vmul.f32 %v144, %v27
    %v152 = vmul.f32 %v149, %v28
    %v153 = vsel %vm94, %v151, 0.0
    %v154 = vsel %vm96, %v152, 0.0
    %v155 = vadd.f32 %v153, %v154
    %v156 = vrot.slane %v155, 4
    %v157 = vadd.f32 %v155, %v156
    %v158 = vrot.slane %v157, 2
    %v159 = vadd.f32 %v157, %v158
    %v160 = vrot.slane %v159, 1
    %v161 = vadd.f32 %v159, %v160
    %v162 = vadd.f32 %v48, %v161
    %v163 = vtanh.pop %v162
    %vm164 = vcmask 74753
    %165 = vst.msk [vmem:[#allocation2] sm:$0x2] %vm164, %v163
    %v167 = vrot.slane %v163, 1
    %169 = vxpose.xlu0.b32.start [1/16] %v167, 128
    %170 = vxpose.xlu0.b32.cont [2/16] 0.0, 128
    %171 = vxpose.xlu0.b32.cont [3/16] 0.0, 128
    %172 = vxpose.xlu0.b32.cont [4/16] 0.0, 128
    %173 = vxpose.xlu0.b32.cont [5/16] 0.0, 128
    %174 = vxpose.xlu0.b32.cont [6/16] 0.0, 128
    %175 = vxpose.xlu0.b32.cont [7/16] 0.0, 128
    %176 = vxpose.xlu0.b32.cont [8/16] 0.0, 128
    %177 = vxpose.xlu0.b32.cont [9/16] 0.0, 128
    %178 = vxpose.xlu0.b32.cont [10/16] 0.0, 128
    %179 = vxpose.xlu0.b32.cont [11/16] 0.0, 128
    %180 = vxpose.xlu0.b32.cont [12/16] 0.0, 128
    %181 = vxpose.xlu0.b32.cont [13/16] 0.0, 128
    %182 = vxpose.xlu0.b32.cont [14/16] 0.0, 128
    %183 = vxpose.xlu0.b32.cont [15/16] 0.0, 128
    %184 = vxpose.xlu0.b32.end [16/16] 0.0, 128
    %v185 = vpop.trf.xlu0
    %v186 = vpop.trf.xlu0
    %v187 = vpop.trf.xlu0
    %v188 = vpop.trf.xlu0
    %v189 = vpop.trf.xlu0
    %v190 = vpop.trf.xlu0
    %v191 = vpop.trf.xlu0
    %v192 = vpop.trf.xlu0
    %v193 = vpop.trf.xlu0
    %v194 = vpop.trf.xlu0
    %v195 = vpop.trf.xlu0
    %v196 = vpop.trf.xlu0
    %v197 = vpop.trf.xlu0
    %v198 = vpop.trf.xlu0
    %v199 = vpop.trf.xlu0
    %v200 = vpop.trf.xlu0
    %202 = vset.pattern.permute.xlu0 0
    %203 = vperm.xlu0 %202, %v185
    %v204 = vpop.permute.xlu0 %203
    %207 = vset.pattern.permute.xlu0 0
    %208 = vperm.xlu0 %207, %v186
    %v209 = vpop.permute.xlu0 %208
    %v211 = vmul.f32 %v204, %v27
    %v212 = vmul.f32 %v209, %v28
    %v213 = vsel %vm94, %v211, 0.0
    %v214 = vsel %vm96, %v212, 0.0
    %v215 = vadd.f32 %v213, %v214
    %v216 = vrot.slane %v215, 4
    %v217 = vadd.f32 %v215, %v216
    %v218 = vrot.slane %v217, 2
    %v219 = vadd.f32 %v217, %v218
    %v220 = vrot.slane %v219, 1
    %v221 = vadd.f32 %v219, %v220
    %v222 = vadd.f32 %v48, %v221
    %v223 = vtanh.pop %v222
    %vm224 = vcmask 75778
    %225 = vst.msk [vmem:[#allocation2] sm:$0x4] %vm224, %v223
    %v227 = vrot.slane %v223, 2
    %229 = vxpose.xlu0.b32.start [1/16] %v227, 128
    %230 = vxpose.xlu0.b32.cont [2/16] 0.0, 128
    %231 = vxpose.xlu0.b32.cont [3/16] 0.0, 128
    %232 = vxpose.xlu0.b32.cont [4/16] 0.0, 128
    %233 = vxpose.xlu0.b32.cont [5/16] 0.0, 128
    %234 = vxpose.xlu0.b32.cont [6/16] 0.0, 128
    %235 = vxpose.xlu0.b32.cont [7/16] 0.0, 128
    %236 = vxpose.xlu0.b32.cont [8/16] 0.0, 128
    %237 = vxpose.xlu0.b32.cont [9/16] 0.0, 128
    %238 = vxpose.xlu0.b32.cont [10/16] 0.0, 128
    %239 = vxpose.xlu0.b32.cont [11/16] 0.0, 128
    %240 = vxpose.xlu0.b32.cont [12/16] 0.0, 128
    %241 = vxpose.xlu0.b32.cont [13/16] 0.0, 128
    %242 = vxpose.xlu0.b32.cont [14/16] 0.0, 128
    %243 = vxpose.xlu0.b32.cont [15/16] 0.0, 128
    %244 = vxpose.xlu0.b32.end [16/16] 0.0, 128
    %v245 = vpop.trf.xlu0
    %v246 = vpop.trf.xlu0
    %v247 = vpop.trf.xlu0
    %v248 = vpop.trf.xlu0
    %v249 = vpop.trf.xlu0
    %v250 = vpop.trf.xlu0
    %v251 = vpop.trf.xlu0
    %v252 = vpop.trf.xlu0
    %v253 = vpop.trf.xlu0
    %v254 = vpop.trf.xlu0
    %v255 = vpop.trf.xlu0
    %v256 = vpop.trf.xlu0
    %v257 = vpop.trf.xlu0
    %v258 = vpop.trf.xlu0
    %v259 = vpop.trf.xlu0
    %v260 = vpop.trf.xlu0
    %262 = vset.pattern.permute.xlu0 0
    %263 = vperm.xlu0 %262, %v245
    %v264 = vpop.permute.xlu0 %263
    %267 = vset.pattern.permute.xlu0 0
    %268 = vperm.xlu0 %267, %v246
    %v269 = vpop.permute.xlu0 %268
    %v271 = vmul.f32 %v264, %v27
    %v272 = vmul.f32 %v269, %v28
    %v273 = vsel %vm94, %v271, 0.0
    %v274 = vsel %vm96, %v272, 0.0
    %v275 = vadd.f32 %v273, %v274
    %v276 = vrot.slane %v275, 4
    %v277 = vadd.f32 %v275, %v276
    %v278 = vrot.slane %v277, 2
    %v279 = vadd.f32 %v277, %v278
    %v280 = vrot.slane %v279, 1
    %v281 = vadd.f32 %v279, %v280
    %v282 = vadd.f32 %v48, %v281
    %v283 = vtanh.pop %v282
    %vm284 = vcmask 76803
    %285 = vst.msk [vmem:[#allocation2] sm:$0x8] %vm284, %v283
    %v287 = vrot.slane %v283, 3
    %289 = vxpose.xlu0.b32.start [1/16] %v287, 128
    %290 = vxpose.xlu0.b32.cont [2/16] 0.0, 128
    %291 = vxpose.xlu0.b32.cont [3/16] 0.0, 128
    %292 = vxpose.xlu0.b32.cont [4/16] 0.0, 128
    %293 = vxpose.xlu0.b32.cont [5/16] 0.0, 128
    %294 = vxpose.xlu0.b32.cont [6/16] 0.0, 128
    %295 = vxpose.xlu0.b32.cont [7/16] 0.0, 128
    %296 = vxpose.xlu0.b32.cont [8/16] 0.0, 128
    %297 = vxpose.xlu0.b32.cont [9/16] 0.0, 128
    %298 = vxpose.xlu0.b32.cont [10/16] 0.0, 128
    %299 = vxpose.xlu0.b32.cont [11/16] 0.0, 128
    %300 = vxpose.xlu0.b32.cont [12/16] 0.0, 128
    %301 = vxpose.xlu0.b32.cont [13/16] 0.0, 128
    %302 = vxpose.xlu0.b32.cont [14/16] 0.0, 128
    %303 = vxpose.xlu0.b32.cont [15/16] 0.0, 128
    %304 = vxpose.xlu0.b32.end [16/16] 0.0, 128
    %v305 = vpop.trf.xlu0
    %v306 = vpop.trf.xlu0
    %v307 = vpop.trf.xlu0
    %v308 = vpop.trf.xlu0
    %v309 = vpop.trf.xlu0
    %v310 = vpop.trf.xlu0
    %v311 = vpop.trf.xlu0
    %v312 = vpop.trf.xlu0
    %v313 = vpop.trf.xlu0
    %v314 = vpop.trf.xlu0
    %v315 = vpop.trf.xlu0
    %v316 = vpop.trf.xlu0
    %v317 = vpop.trf.xlu0
    %v318 = vpop.trf.xlu0
    %v319 = vpop.trf.xlu0
    %v320 = vpop.trf.xlu0
    %322 = vset.pattern.permute.xlu0 0
    %323 = vperm.xlu0 %322, %v305
    %v324 = vpop.permute.xlu0 %323
    %327 = vset.pattern.permute.xlu0 0
    %328 = vperm.xlu0 %327, %v306
    %v329 = vpop.permute.xlu0 %328
    %v331 = vmul.f32 %v324, %v27
    %v332 = vmul.f32 %v329, %v28
    %v333 = vsel %vm94, %v331, 0.0
    %v334 = vsel %vm96, %v332, 0.0
    %v335 = vadd.f32 %v333, %v334
    %v336 = vrot.slane %v335, 4
    %v337 = vadd.f32 %v335, %v336
    %v338 = vrot.slane %v337, 2
    %v339 = vadd.f32 %v337, %v338
    %v340 = vrot.slane %v339, 1
    %v341 = vadd.f32 %v339, %v340
    %v342 = vadd.f32 %v48, %v341
    %v343 = vtanh.pop %v342
    %vm344 = vcmask 77828
    %345 = vst.msk [vmem:[#allocation2] sm:$0x10] %vm344, %v343
    %v347 = vrot.slane %v343, 4
    %349 = vxpose.xlu0.b32.start [1/16] %v347, 128
    %350 = vxpose.xlu0.b32.cont [2/16] 0.0, 128
    %351 = vxpose.xlu0.b32.cont [3/16] 0.0, 128
    %352 = vxpose.xlu0.b32.cont [4/16] 0.0, 128
    %353 = vxpose.xlu0.b32.cont [5/16] 0.0, 128
    %354 = vxpose.xlu0.b32.cont [6/16] 0.0, 128
    %355 = vxpose.xlu0.b32.cont [7/16] 0.0, 128
    %356 = vxpose.xlu0.b32.cont [8/16] 0.0, 128
    %357 = vxpose.xlu0.b32.cont [9/16] 0.0, 128
    %358 = vxpose.xlu0.b32.cont [10/16] 0.0, 128
    %359 = vxpose.xlu0.b32.cont [11/16] 0.0, 128
    %360 = vxpose.xlu0.b32.cont [12/16] 0.0, 128
    %361 = vxpose.xlu0.b32.cont [13/16] 0.0, 128
    %362 = vxpose.xlu0.b32.cont [14/16] 0.0, 128
    %363 = vxpose.xlu0.b32.cont [15/16] 0.0, 128
    %364 = vxpose.xlu0.b32.end [16/16] 0.0, 128
    %v365 = vpop.trf.xlu0
    %v366 = vpop.trf.xlu0
    %v367 = vpop.trf.xlu0
    %v368 = vpop.trf.xlu0
    %v369 = vpop.trf.xlu0
    %v370 = vpop.trf.xlu0
    %v371 = vpop.trf.xlu0
    %v372 = vpop.trf.xlu0
    %v373 = vpop.trf.xlu0
    %v374 = vpop.trf.xlu0
    %v375 = vpop.trf.xlu0
    %v376 = vpop.trf.xlu0
    %v377 = vpop.trf.xlu0
    %v378 = vpop.trf.xlu0
    %v379 = vpop.trf.xlu0
    %v380 = vpop.trf.xlu0
    %382 = vset.pattern.permute.xlu0 0
    %383 = vperm.xlu0 %382, %v365
    %v384 = vpop.permute.xlu0 %383
    %387 = vset.pattern.permute.xlu0 0
    %388 = vperm.xlu0 %387, %v366
    %v389 = vpop.permute.xlu0 %388
    %v391 = vmul.f32 %v384, %v27
    %v392 = vmul.f32 %v389, %v28
    %v393 = vsel %vm94, %v391, 0.0
    %v394 = vsel %vm96, %v392, 0.0
    %v395 = vadd.f32 %v393, %v394
    %v396 = vrot.slane %v395, 4
    %v397 = vadd.f32 %v395, %v396
    %v398 = vrot.slane %v397, 2
    %v399 = vadd.f32 %v397, %v398
    %v400 = vrot.slane %v399, 1
    %v401 = vadd.f32 %v399, %v400
    %v402 = vadd.f32 %v48, %v401
    %v403 = vtanh.pop %v402
    %vm404 = vcmask 78853
    %405 = vst.msk [vmem:[#allocation2] sm:$0x20] %vm404, %v403
    %v407 = vrot.slane %v403, 5
    %409 = vxpose.xlu0.b32.start [1/16] %v407, 128
    %410 = vxpose.xlu0.b32.cont [2/16] 0.0, 128
    %411 = vxpose.xlu0.b32.cont [3/16] 0.0, 128
    %412 = vxpose.xlu0.b32.cont [4/16] 0.0, 128
    %413 = vxpose.xlu0.b32.cont [5/16] 0.0, 128
    %414 = vxpose.xlu0.b32.cont [6/16] 0.0, 128
    %415 = vxpose.xlu0.b32.cont [7/16] 0.0, 128
    %416 = vxpose.xlu0.b32.cont [8/16] 0.0, 128
    %417 = vxpose.xlu0.b32.cont [9/16] 0.0, 128
    %418 = vxpose.xlu0.b32.cont [10/16] 0.0, 128
    %419 = vxpose.xlu0.b32.cont [11/16] 0.0, 128
    %420 = vxpose.xlu0.b32.cont [12/16] 0.0, 128
    %421 = vxpose.xlu0.b32.cont [13/16] 0.0, 128
    %422 = vxpose.xlu0.b32.cont [14/16] 0.0, 128
    %423 = vxpose.xlu0.b32.cont [15/16] 0.0, 128
    %424 = vxpose.xlu0.b32.end [16/16] 0.0, 128
    %v425 = vpop.trf.xlu0
    %v426 = vpop.trf.xlu0
    %v427 = vpop.trf.xlu0
    %v428 = vpop.trf.xlu0
    %v429 = vpop.trf.xlu0
    %v430 = vpop.trf.xlu0
    %v431 = vpop.trf.xlu0
    %v432 = vpop.trf.xlu0
    %v433 = vpop.trf.xlu0
    %v434 = vpop.trf.xlu0
    %v435 = vpop.trf.xlu0
    %v436 = vpop.trf.xlu0
    %v437 = vpop.trf.xlu0
    %v438 = vpop.trf.xlu0
    %v439 = vpop.trf.xlu0
    %v440 = vpop.trf.xlu0
    %442 = vset.pattern.permute.xlu0 0
    %443 = vperm.xlu0 %442, %v425
    %v444 = vpop.permute.xlu0 %443
    %447 = vset.pattern.permute.xlu0 0
    %448 = vperm.xlu0 %447, %v426
    %v449 = vpop.permute.xlu0 %448
    %v451 = vmul.f32 %v444, %v27
    %v452 = vmul.f32 %v449, %v28
    %v453 = vsel %vm94, %v451, 0.0
    %v454 = vsel %vm96, %v452, 0.0
    %v455 = vadd.f32 %v453, %v454
    %v456 = vrot.slane %v455, 4
    %v457 = vadd.f32 %v455, %v456
    %v458 = vrot.slane %v457, 2
    %v459 = vadd.f32 %v457, %v458
    %v460 = vrot.slane %v459, 1
    %v461 = vadd.f32 %v459, %v460
    %v462 = vadd.f32 %v48, %v461
    %v463 = vtanh.pop %v462
    %vm464 = vcmask 79878
    %465 = vst.msk [vmem:[#allocation2] sm:$0x40] %vm464, %v463
    %v467 = vrot.slane %v463, 6
    %469 = vxpose.xlu0.b32.start [1/16] %v467, 128
    %470 = vxpose.xlu0.b32.cont [2/16] 0.0, 128
    %471 = vxpose.xlu0.b32.cont [3/16] 0.0, 128
    %472 = vxpose.xlu0.b32.cont [4/16] 0.0, 128
    %473 = vxpose.xlu0.b32.cont [5/16] 0.0, 128
    %474 = vxpose.xlu0.b32.cont [6/16] 0.0, 128
    %475 = vxpose.xlu0.b32.cont [7/16] 0.0, 128
    %476 = vxpose.xlu0.b32.cont [8/16] 0.0, 128
    %477 = vxpose.xlu0.b32.cont [9/16] 0.0, 128
    %478 = vxpose.xlu0.b32.cont [10/16] 0.0, 128
    %479 = vxpose.xlu0.b32.cont [11/16] 0.0, 128
    %480 = vxpose.xlu0.b32.cont [12/16] 0.0, 128
    %481 = vxpose.xlu0.b32.cont [13/16] 0.0, 128
    %482 = vxpose.xlu0.b32.cont [14/16] 0.0, 128
    %483 = vxpose.xlu0.b32.cont [15/16] 0.0, 128
    %484 = vxpose.xlu0.b32.end [16/16] 0.0, 128
    %v485 = vpop.trf.xlu0
    %v486 = vpop.trf.xlu0
    %v487 = vpop.trf.xlu0
    %v488 = vpop.trf.xlu0
    %v489 = vpop.trf.xlu0
    %v490 = vpop.trf.xlu0
    %v491 = vpop.trf.xlu0
    %v492 = vpop.trf.xlu0
    %v493 = vpop.trf.xlu0
    %v494 = vpop.trf.xlu0
    %v495 = vpop.trf.xlu0
    %v496 = vpop.trf.xlu0
    %v497 = vpop.trf.xlu0
    %v498 = vpop.trf.xlu0
    %v499 = vpop.trf.xlu0
    %v500 = vpop.trf.xlu0
    %502 = vset.pattern.permute.xlu0 0
    %503 = vperm.xlu0 %502, %v485
    %v504 = vpop.permute.xlu0 %503
    %507 = vset.pattern.permute.xlu0 0
    %508 = vperm.xlu0 %507, %v486
    %v509 = vpop.permute.xlu0 %508
    %v511 = vmul.f32 %v504, %v27
    %v512 = vmul.f32 %v509, %v28
    %v513 = vsel %vm94, %v511, 0.0
    %v514 = vsel %vm96, %v512, 0.0
    %v515 = vadd.f32 %v513, %v514
    %v516 = vrot.slane %v515, 4
    %v517 = vadd.f32 %v515, %v516
    %v518 = vrot.slane %v517, 2
    %v519 = vadd.f32 %v517, %v518
    %v520 = vrot.slane %v519, 1
    %v521 = vadd.f32 %v519, %v520
    %v522 = vadd.f32 %v48, %v521
    %v523 = vtanh.pop %v522
    %vm524 = vcmask 80903
    %525 = vst.msk [vmem:[#allocation2] sm:$0x80] %vm524, %v523
    %v526 = vld [vmem:[#allocation2] sm:$0xff]
    %v527 = vlaneseq
    %v528 = vshrl.u32 %v527, 7
    %v529 = vsub.s32 0, %v528
    %v530 = vrot.slane %v31, %v529
    %v531 = vmul.f32 %v526, %v530
    %v532 = vsel %vm94, %v531, 0.0
    %533 = vadd.xlane.f32.xlu0 %v532
    %v534 = vpop.xlane.xlu0 %533
    %v535 = vlaneseq
    %v536 = vshrl.u32 %v535, 7
    %v537 = vsub.s32 0, %v536
    %v538 = vrot.slane %v32, %v537
    %v539 = vadd.f32 %v534, %v538
    %vm540 = vcmask 123904
    %541 = vst.msk [vmem:[#allocation6] sm:$0x3] %vm540, 0.0
    %542 = vxpose.xlu0.b32.start [1/16] %v539, 128
    %543 = vxpose.xlu0.b32.cont [2/16] 0.0, 128
    %544 = vxpose.xlu0.b32.cont [3/16] 0.0, 128
    %545 = vxpose.xlu0.b32.cont [4/16] 0.0, 128
    %546 = vxpose.xlu0.b32.cont [5/16] 0.0, 128
    %547 = vxpose.xlu0.b32.cont [6/16] 0.0, 128
    %548 = vxpose.xlu0.b32.cont [7/16] 0.0, 128
    %549 = vxpose.xlu0.b32.cont [8/16] 0.0, 128
    %550 = vxpose.xlu0.b32.cont [9/16] 0.0, 128
    %551 = vxpose.xlu0.b32.cont [10/16] 0.0, 128
    %552 = vxpose.xlu0.b32.cont [11/16] 0.0, 128
    %553 = vxpose.xlu0.b32.cont [12/16] 0.0, 128
    %554 = vxpose.xlu0.b32.cont [13/16] 0.0, 128
    %555 = vxpose.xlu0.b32.cont [14/16] 0.0, 128
    %556 = vxpose.xlu0.b32.cont [15/16] 0.0, 128
    %557 = vxpose.xlu0.b32.end [16/16] 0.0, 128
    %v558 = vpop.trf.xlu0
    %v559 = vpop.trf.xlu0
    %v560 = vpop.trf.xlu0
    %v561 = vpop.trf.xlu0
    %v562 = vpop.trf.xlu0
    %v563 = vpop.trf.xlu0
    %v564 = vpop.trf.xlu0
    %v565 = vpop.trf.xlu0
    %v566 = vpop.trf.xlu0
    %v567 = vpop.trf.xlu0
    %v568 = vpop.trf.xlu0
    %v569 = vpop.trf.xlu0
    %v570 = vpop.trf.xlu0
    %v571 = vpop.trf.xlu0
    %v572 = vpop.trf.xlu0
    %v573 = vpop.trf.xlu0
    %vm574 = vcmask 57344
    %575 = vst.msk [vmem:[#allocation6] sm:$0x1] %vm574, %v558
    %576 = vst.msk [vmem:[#allocation6 - $0x6] sm:$0x80] %vm524, %v523
    // Predicated region
    $region18: #{tpu_custom_call.1} parent=1 // pred_check
      _
    $region19: #{tpu_custom_call.1} parent=1 // pred_check_branch
      %578 = sbr.rel (0) target = $region21
    $region20: #{tpu_custom_call.1} parent=1 // pred_region
      %s580 = ssub.s32 32, 32
      %581 = vsyncadd [#allocation5], %s580
      %s583 = sshll.u32 [#allocation6], 4
      %s584 = int_to_ptr.vmem [resolvable:$true] %s583
      %586 = dma.vmem_to_hbm [thread:$0]  %s584, 32, %s3, [#allocation5]
    $region21: #{tpu_custom_call.1} parent=1 // pred_fallthru
      _
    // Predicated region
    $region22: #{tpu_custom_call.1} parent=1 // pred_check
      _
    $region23: #{tpu_custom_call.1} parent=1 // pred_check_branch
      %588 = sbr.rel (0) target = $region25
    $region24: #{tpu_custom_call.1} parent=1 // pred_region
      %589 = dma.done [#allocation5], 32
    $region25: #{tpu_custom_call.1} parent=1 // pred_fallthru
      _
    %590 = vsyncpa [#allocation4], 1
    %591 = vsyncpa [#allocation5], 1

</llo_original>
